<compile_context>
chip_gen: v7x
topology: tpu7x:2x2x1
jax: 0.10.0
libtpu: 0.0.40
codegen_flags: <defaults>
</compile_context>

<pallas_src>
import jax
import jax.numpy as jnp
from jax import lax
from jax.experimental import pallas as pl
from jax.experimental.pallas import tpu as pltpu


def _round_up(x, m):
    return ((x + m - 1) // m) * m


def _make_embedding_kernel(tokens_per_step, dma_slots, vocab):
    """Build a kernel gathering `tokens_per_step` table rows per grid step."""

    def kernel(ids_ref, w_hbm, o_ref, staging, sem):
        # ids_ref:  SMEM scalar-prefetch ref with all (padded) token ids.
        # w_hbm:    full embedding table, left in HBM (pl.ANY).
        # o_ref:    (T, hidden) float32 output block.
        # staging:  (T, hidden) VMEM slab in the table dtype (DMA destination).
        # sem:      (K,) DMA semaphores -> K row copies in flight.
        base = pl.program_id(0) * tokens_per_step

        def issue(t, carry):
            row = jnp.clip(ids_ref[base + t], 0, vocab - 1)
            slot = t % dma_slots

            # Before reusing a semaphore slot, retire the copy issued K steps ago
            # (same transfer size, so a dummy descriptor is fine for the wait).
            @pl.when(t >= dma_slots)
            def _():
                pltpu.make_async_copy(
                    w_hbm.at[pl.ds(0, 1)], staging.at[pl.ds(0, 1)], sem.at[slot]
                ).wait()

            pltpu.make_async_copy(
                w_hbm.at[pl.ds(row, 1)], staging.at[pl.ds(t, 1)], sem.at[slot]
            ).start()
            return carry

        lax.fori_loop(0, tokens_per_step, issue, 0)

        # Drain the remaining in-flight copies.
        def drain(slot, carry):
            pltpu.make_async_copy(
                w_hbm.at[pl.ds(0, 1)], staging.at[pl.ds(0, 1)], sem.at[slot]
            ).wait()
            return carry

        lax.fori_loop(0, min(tokens_per_step, dma_slots), drain, 0)

        # Dense (T, hidden) store + the module's `.float()` cast.
        o_ref[...] = staging[...].astype(o_ref.dtype)

    return kernel


def embedding_forward(input_ids, table, *, tokens_per_step=256, dma_slots=8):
    """input_ids: int [batch, seq]; table: [vocab, hidden] -> f32 [batch, seq, hidden]."""
    batch, seq = input_ids.shape
    vocab, hidden = table.shape
    n_tok = batch * seq

    # Tokens per grid step: sublane-dense (>= 8), capped so the output tile
    # (double-buffered) + staging stays well inside VMEM even on v7x (64 MiB).
    T = min(tokens_per_step, _round_up(n_tok, 8))
    n_pad = _round_up(n_tok, T)
    grid = n_pad // T
    K = min(dma_slots, T)

    ids_flat = input_ids.reshape(n_tok).astype(jnp.int32)
    if n_pad != n_tok:
        ids_flat = jnp.pad(ids_flat, (0, n_pad - n_tok))  # padded slots gather row 0

    kernel = _make_embedding_kernel(T, K, vocab)

    out_flat = pl.pallas_call(
        kernel,
        out_shape=jax.ShapeDtypeStruct((n_pad, hidden), jnp.float32),
        grid_spec=pltpu.PrefetchScalarGridSpec(
            num_scalar_prefetch=1,
            grid=(grid,),
            in_specs=[
                # Embedding table stays in HBM; rows are gathered manually.
                pl.BlockSpec(memory_space=pl.ANY),
            ],
            out_specs=pl.BlockSpec((T, hidden), lambda i, ids: (i, 0)),
            scratch_shapes=[
                pltpu.VMEM((T, hidden), table.dtype),
                pltpu.SemaphoreType.DMA((K,)),
            ],
        ),
        compiler_params=pltpu.CompilerParams(
            # Token tiles are independent -> shard across v7x's 2 TensorCores;
            # neutral on v5e/v6e.
            dimension_semantics=("parallel",),
        ),
    )(ids_flat, table)

    if n_pad != n_tok:
        out_flat = out_flat[:n_tok]
    return out_flat.reshape(batch, seq, hidden)


if __name__ == "__main__":
    # Deterministic synthetic parameters (the module itself holds no params;
    # wte weight shape is [vocab_size, hidden_size]).
    vocab_size = 256
    hidden_size = 128
    batch, seq = 2, 8

    key = jax.random.PRNGKey(0)
    k_w, k_ids = jax.random.split(key)
    wte_weight = jax.random.normal(k_w, (vocab_size, hidden_size), dtype=jnp.float32)
    input_ids = jax.random.randint(k_ids, (batch, seq), 0, vocab_size, dtype=jnp.int32)

    out = embedding_forward(input_ids, wte_weight)
    out = jax.block_until_ready(out)

    # Reference check (plain JAX gather + .float()).
    ref = wte_weight[input_ids].astype(jnp.float32)
    assert out.shape == (batch, seq, hidden_size)
    assert out.dtype == jnp.float32
    assert jnp.allclose(out, ref), "mismatch vs reference embedding lookup"

    print("KERNEL_OK")
</pallas_src>

<mosaic_0001>
module attributes {stable_mosaic.version = 11 : i64} {
  func.func @kernel(%arg0: i32, %arg1: memref<16xi32, #tpu.memory_space<smem>>, %arg2: memref<256x128xf32, #tpu.memory_space<any>>, %arg3: memref<16x128xf32, #tpu.memory_space<vmem>>, %arg4: memref<16x128xf32, #tpu.memory_space<vmem>>, %arg5: memref<8x!tpu.dma_semaphore, #tpu.memory_space<semaphore_mem>>) attributes {dimension_semantics = [#tpu.dimension_semantics<parallel>], iteration_bounds = array<i64: 1>, scalar_prefetch = 1 : i64, scratch_operands = 2 : i64, tpu.core_type = #tpu.core_type<tc>, window_params = [{}, {transform_indices = @transform_1, window_bounds = array<i64: 16, 128>}]} {
    %c16_i32 = arith.constant 16 : i32
    %0 = arith.muli %arg0, %c16_i32 : i32
    %c0_i32 = arith.constant 0 : i32
    %c16_i32_0 = arith.constant 16 : i32
    %1 = arith.addi %c0_i32, %c16_i32_0 : i32
    %c1_i32 = arith.constant 1 : i32
    scf.for %arg6 = %c0_i32 to %1 step %c1_i32  : i32 {
      %5 = arith.addi %0, %arg6 : i32
      %6 = arith.index_cast %5 : i32 to index
      %7 = memref.load %arg1[%6] : memref<16xi32, #tpu.memory_space<smem>>
      %c0_i32_8 = arith.constant 0 : i32
      %c255_i32 = arith.constant 255 : i32
      %8 = arith.maxsi %c0_i32_8, %7 : i32
      %9 = arith.minsi %c255_i32, %8 : i32
      %c8_i32_9 = arith.constant 8 : i32
      %c0_i32_10 = arith.constant 0 : i32
      %10 = arith.cmpi eq, %c8_i32_9, %c0_i32_10 : i32
      %c1_i32_11 = arith.constant 1 : i32
      %11 = arith.select %10, %c1_i32_11, %c8_i32_9 : i32
      %12 = arith.remsi %arg6, %11 : i32
      %c0_i32_12 = arith.constant 0 : i32
      %13 = arith.cmpi ne, %12, %c0_i32_12 : i32
      %c0_i32_13 = arith.constant 0 : i32
      %14 = arith.cmpi slt, %12, %c0_i32_13 : i32
      %c0_i32_14 = arith.constant 0 : i32
      %15 = arith.cmpi slt, %11, %c0_i32_14 : i32
      %16 = arith.xori %14, %15 : i1
      %17 = arith.andi %16, %13 : i1
      %18 = arith.addi %12, %11 : i32
      %19 = arith.select %17, %18, %12 : i32
      %c8_i32_15 = arith.constant 8 : i32
      %20 = arith.cmpi sge, %arg6, %c8_i32_15 : i32
      %21 = arith.extui %20 : i1 to i32
      %c0_i32_16 = arith.constant 0 : i32
      %22 = arith.cmpi ne, %21, %c0_i32_16 : i32
      scf.if %22 {
        %c0_i32_19 = arith.constant 0 : i32
        %c0_i32_20 = arith.constant 0 : i32
        %27 = tpu.memref_slice %arg2[%c0_i32_19, %c0_i32_20] : memref<256x128xf32, #tpu.memory_space<any>> -> memref<1x128xf32, #tpu.memory_space<any>>
        %c0_i32_21 = arith.constant 0 : i32
        %c0_i32_22 = arith.constant 0 : i32
        %28 = tpu.memref_slice %arg4[%c0_i32_21, %c0_i32_22] : memref<16x128xf32, #tpu.memory_space<vmem>> -> memref<1x128xf32, #tpu.memory_space<vmem>>
        %29 = tpu.memref_slice %arg5[%19] : memref<8x!tpu.dma_semaphore, #tpu.memory_space<semaphore_mem>> -> memref<1x!tpu.dma_semaphore, #tpu.memory_space<semaphore_mem>>
        %30 = tpu.memref_squeeze %29 : memref<1x!tpu.dma_semaphore, #tpu.memory_space<semaphore_mem>> -> memref<!tpu.dma_semaphore, #tpu.memory_space<semaphore_mem>>
        tpu.wait_dma2 semaphore(%30 : memref<!tpu.dma_semaphore, #tpu.memory_space<semaphore_mem>>) src(%27 : memref<1x128xf32, #tpu.memory_space<any>>) dst(%28 : memref<1x128xf32, #tpu.memory_space<vmem>>)
      } else {
      }
      %c0_i32_17 = arith.constant 0 : i32
      %23 = tpu.memref_slice %arg2[%9, %c0_i32_17] : memref<256x128xf32, #tpu.memory_space<any>> -> memref<1x128xf32, #tpu.memory_space<any>>
      %c0_i32_18 = arith.constant 0 : i32
      %24 = tpu.memref_slice %arg4[%arg6, %c0_i32_18] : memref<16x128xf32, #tpu.memory_space<vmem>> -> memref<1x128xf32, #tpu.memory_space<vmem>>
      %25 = tpu.memref_slice %arg5[%19] : memref<8x!tpu.dma_semaphore, #tpu.memory_space<semaphore_mem>> -> memref<1x!tpu.dma_semaphore, #tpu.memory_space<semaphore_mem>>
      %26 = tpu.memref_squeeze %25 : memref<1x!tpu.dma_semaphore, #tpu.memory_space<semaphore_mem>> -> memref<!tpu.dma_semaphore, #tpu.memory_space<semaphore_mem>>
      tpu.enqueue_dma source(%23 : memref<1x128xf32, #tpu.memory_space<any>>) target(%24 : memref<1x128xf32, #tpu.memory_space<vmem>>) target_semaphore(%26 : memref<!tpu.dma_semaphore, #tpu.memory_space<semaphore_mem>>)
    }
    %c16_i32_1 = arith.constant 16 : i32
    %c0_i32_2 = arith.constant 0 : i32
    %c8_i32 = arith.constant 8 : i32
    %2 = arith.addi %c0_i32_2, %c8_i32 : i32
    %c1_i32_3 = arith.constant 1 : i32
    scf.for %arg6 = %c0_i32_2 to %2 step %c1_i32_3  : i32 {
      %c0_i32_8 = arith.constant 0 : i32
      %c0_i32_9 = arith.constant 0 : i32
      %5 = tpu.memref_slice %arg2[%c0_i32_8, %c0_i32_9] : memref<256x128xf32, #tpu.memory_space<any>> -> memref<1x128xf32, #tpu.memory_space<any>>
      %c0_i32_10 = arith.constant 0 : i32
      %c0_i32_11 = arith.constant 0 : i32
      %6 = tpu.memref_slice %arg4[%c0_i32_10, %c0_i32_11] : memref<16x128xf32, #tpu.memory_space<vmem>> -> memref<1x128xf32, #tpu.memory_space<vmem>>
      %7 = tpu.memref_slice %arg5[%arg6] : memref<8x!tpu.dma_semaphore, #tpu.memory_space<semaphore_mem>> -> memref<1x!tpu.dma_semaphore, #tpu.memory_space<semaphore_mem>>
      %8 = tpu.memref_squeeze %7 : memref<1x!tpu.dma_semaphore, #tpu.memory_space<semaphore_mem>> -> memref<!tpu.dma_semaphore, #tpu.memory_space<semaphore_mem>>
      tpu.wait_dma2 semaphore(%8 : memref<!tpu.dma_semaphore, #tpu.memory_space<semaphore_mem>>) src(%5 : memref<1x128xf32, #tpu.memory_space<any>>) dst(%6 : memref<1x128xf32, #tpu.memory_space<vmem>>)
    }
    %c8_i32_4 = arith.constant 8 : i32
    %c0 = arith.constant 0 : index
    %c0_5 = arith.constant 0 : index
    %3 = vector.load %arg4[%c0, %c0_5] : memref<16x128xf32, #tpu.memory_space<vmem>>, vector<16x128xf32>
    %c0_6 = arith.constant 0 : index
    %c0_7 = arith.constant 0 : index
    %4 = vector.load %arg3[%c0_6, %c0_7] : memref<16x128xf32, #tpu.memory_space<vmem>>, vector<16x128xf32>
    tpu.vector_store %arg3[%c0_6, %c0_7], %3 {strides = array<i32>} : memref<16x128xf32, #tpu.memory_space<vmem>>, vector<16x128xf32>,
    return
  }
  func.func @transform_1(%arg0: i32, %arg1: memref<16xi32, #tpu.memory_space<smem>>) -> (i32, i32) {
    %c0_i32 = arith.constant 0 : i32
    %c0_i32_0 = arith.constant 0 : i32
    return %arg0, %c0_i32 : i32, i32
  }
}

</mosaic_0001>

<llo_original>
// kernel: tpu_custom_call.1
$region0: #{tpu_custom_call.1}
  #allocation0 [shape = 'u32[]', space=smem, size = 0x4, offset = 0x4, fixed_abs, tag = 'smem constant byte address 0x4 - core index']
  #allocation1 [shape = 'u32[144,128]{1,0:T(1,128)}', space=vmem, size = 0x12000, scoped, tag = 'internal scratch']
  #allocation2 [shape = 'f32[16,128]{1,0:T(8,128)}', space=vmem, size = 0x2000, scoped, tag = 'scratch operand']
  #allocation3 [shape = 's32[8]{0}', space=sflag, size = 0x20, scoped, tag = 'scratch operand']
  #allocation4 [shape = 's32[1]{0}', space=sflag, size = 0x4, scoped, tag = 'scoped memory for tpu_custom_call.1']
  #allocation5 [shape = 'u8[512]{0}', space=smem, size = 0x200, scoped, tag = 'prefetched SMEM operand 0']
  #allocation8 [shape = 's32[]', space=sflag, size = 0x4, offset = 0, fixed_abs, tag = 'sflag constant byte address 0x0 - dummy sync flag']
  #allocation9 [shape = 's32[]', space=sflag, size = 0x4, offset = 0, fixed_abs, tag = 'sflag constant byte address 0x0 - dummy sync flag']
  #allocation10 [shape = 'u32[]', space=smem, size = 0x4, offset = 0x44, fixed_abs, tag = 'smem constant byte address 0x44 - assertion arg 0']
  #allocation11 [shape = 'u32[]', space=smem, size = 0x4, offset = 0x48, fixed_abs, tag = 'smem constant byte address 0x48 - assertion arg 1']
  %s0 = inlined_call_operand.hbm [shape: s32[16], index: 0, kind: input, shape index: {}]
  %s1 = inlined_call_operand.hbm [shape: f32[256,128], index: 1, kind: input, shape index: {}]
  %s2 = inlined_call_operand.hbm [shape: f32[16,128], index: 2, kind: output, shape index: {}]
  %s3 = sld [smem:[#allocation0]]
  $region32: #{tpu_custom_call.1} parent=0
    _
  %s5 = ssub.s32 1, %s3
  %s6 = scalar_select 0, %s5, %s3
  %8 = dma.hbm_to_smem %s0, 16, [#allocation5], [#allocation4]
  %9 = dma.done [#allocation4], 16
  %10 = sfence
  $region1: #{tpu_custom_call.1} parent=0
    #allocation6 [shape = 'u8[8192]{0}', space=vmem, size = 0x2000, scoped, tag = 'output window, operand 0, single buffered']
    #allocation7 [shape = 's32[1]{0}', space=sflag, size = 0x4, scoped, tag = 'scoped memory for tpu_custom_call.1']
    %11 = vsyncpa [#allocation7], 0
    %s12 = smul.u32 0, 16
    loop: start=0, step=1, limit=16
    $region2: #{tpu_custom_call.1} parent=1 // loop_pre_header
      _
    $region3: #{tpu_custom_call.1} parent=1 // loop_header
      %s14 = sphi 0, %s18
      %p15 = scmp.ge.s32.totalorder %s14, 16
    $region4: #{tpu_custom_call.1} parent=1 // loop_header_branch
      %17 = sbr.rel (%p15) target = $region8
    $region5: #{tpu_custom_call.1} parent=1 // loop_body
      %s19 = sadd.s32 %s12, %s14
      %s20 = sld [smem:[#allocation5 + %s19]]
      %p21 = scmp.gt.s32.totalorder %s20, 0
      %s22 = scalar_select %p21, %s20, 0
      %p23 = scmp.lt.s32.totalorder %s22, 255
      %s24 = scalar_select %p23, %s22, 255
      %p25 = scmp.lt.s32.totalorder %s14, 0
      %s26 = ssub.s32 0, %s14
      %s27 = scalar_select %p25, %s26, %s14
      %s28 = sand.u32 %s27, 7
      %s29 = ssub.s32 0, %s28
      %s30 = scalar_select %p25, %s29, %s28
      %p31 = scmp.ne.s32.totalorder %s30, 0
      %p32 = scmp.lt.s32.totalorder %s30, 0
      %p33 = pnand %p32, %p31
      %p34 = pneg %p33
      %s35 = sadd.s32 %s30, 8
      %s36 = scalar_select %p34, %s35, %s30
      %p37 = scmp.ge.s32.totalorder %s14, 8
      // Predicated region
      $region9: #{tpu_custom_call.1} parent=5 // pred_check
        %p38 = pneg %p37
      $region10: #{tpu_custom_call.1} parent=5 // pred_check_branch
        %40 = sbr.rel (%p38) target = $region12
      $region11: #{tpu_custom_call.1} parent=5 // pred_region
        %s41 = scalar_lea.sflag [#allocation3], %s36
        %s42 = smul.u32 1, 1
        %s43 = sshll.u32 %s42, 4
        %44 = dma.done %s41, %s43
      $region12: #{tpu_custom_call.1} parent=5 // pred_fallthru
        _
      %s45 = smul.addr %s24, 16
      %s46 = scalar_lea.hbm %s1, %s45
      %s47 = scalar_lea.vmem [#allocation2], %s14
      %s48 = scalar_lea.sflag [#allocation3], %s36
      // Predicated region
      $region13: #{tpu_custom_call.1} parent=5 // pred_check
        _
      $region14: #{tpu_custom_call.1} parent=5 // pred_check_branch
        %50 = sbr.rel target = $region16
      $region15: #{tpu_custom_call.1} parent=5 // pred_region
        %51 = sst [smem:[#allocation10]] [#allocation9]
        %52 = sst [smem:[#allocation11]] [#allocation8]
      $region16: #{tpu_custom_call.1} parent=5 // pred_fallthru
        _
      %54 = shalt.err (0)
      %s56 = sshll.u32 %s47, 4
      %s57 = int_to_ptr.vmem [resolvable:$true] %s56
      %59 = dma.hbm_to_vmem [thread:$0]  %s46, 16, %s57, %s48
    $region6: #{tpu_custom_call.1} parent=1 // loop_footer
      %s18 = sadd.s32 1, %s14
    $region7: #{tpu_custom_call.1} parent=1 // loop_footer_branch
      %13 = sbr.rel target = $region3
    $region8: #{tpu_custom_call.1} parent=1 // loop_exit
      _
    loop: start=0, step=1, limit=8
    $region17: #{tpu_custom_call.1} parent=1 // loop_pre_header
      _
    $region18: #{tpu_custom_call.1} parent=1 // loop_header
      %s61 = sphi 0, %s65
      %p62 = scmp.ge.s32.totalorder %s61, 8
    $region19: #{tpu_custom_call.1} parent=1 // loop_header_branch
      %64 = sbr.rel (%p62) target = $region23
    $region20: #{tpu_custom_call.1} parent=1 // loop_body
      %s66 = scalar_lea.sflag [#allocation3], %s61
      %s67 = smul.u32 1, 1
      %s68 = sshll.u32 %s67, 4
      %69 = dma.done %s66, %s68
    $region21: #{tpu_custom_call.1} parent=1 // loop_footer
      %s65 = sadd.s32 1, %s61
    $region22: #{tpu_custom_call.1} parent=1 // loop_footer_branch
      %60 = sbr.rel target = $region18
    $region23: #{tpu_custom_call.1} parent=1 // loop_exit
      _
    %v70 = vld [vmem:[#allocation2] sm:$0xff]
    %v71 = vld [vmem:[#allocation2 + $0x8] sm:$0xff]
    %72 = vst [vmem:[#allocation6] sm:$0xff] %v70
    %73 = vst [vmem:[#allocation6 + $0x8] sm:$0xff] %v71
    // Predicated region
    $region24: #{tpu_custom_call.1} parent=1 // pred_check
      _
    $region25: #{tpu_custom_call.1} parent=1 // pred_check_branch
      %75 = sbr.rel (0) target = $region27
    $region26: #{tpu_custom_call.1} parent=1 // pred_region
      %s77 = ssub.s32 256, 256
      %78 = vsyncadd [#allocation7], %s77
      %s79 = sshll.u32 [#allocation6], 4
      %s80 = int_to_ptr.vmem [resolvable:$true] %s79
      %85 = dma.vmem_to_hbm [thread:$0]  %s80, 256, %s2, [#allocation7], 128, 128, 8
    $region27: #{tpu_custom_call.1} parent=1 // pred_fallthru
      _
    // Predicated region
    $region28: #{tpu_custom_call.1} parent=1 // pred_check
      _
    $region29: #{tpu_custom_call.1} parent=1 // pred_check_branch
      %87 = sbr.rel (0) target = $region31
    $region30: #{tpu_custom_call.1} parent=1 // pred_region
      %88 = dma.done [#allocation7], 256
    $region31: #{tpu_custom_call.1} parent=1 // pred_fallthru
      _
    %89 = vsyncpa [#allocation7], 1
  %90 = vsyncmov [#allocation3]
  %s91 = vpop.sfrf %90
  %p92 = scmp.eq.s32.totalorder %s91, 0
  %p93 = pneg %p92
  %95 = shalt.err (%p93)
  %s96 = scalar_lea.sflag [#allocation3], 1
  %97 = vsyncmov %s96
  %s98 = vpop.sfrf %97
  %p99 = scmp.eq.s32.totalorder %s98, 0
  %p100 = pneg %p99
  %102 = shalt.err (%p100)
  %s103 = scalar_lea.sflag [#allocation3], 2
  %104 = vsyncmov %s103
  %s105 = vpop.sfrf %104
  %p106 = scmp.eq.s32.totalorder %s105, 0
  %p107 = pneg %p106
  %109 = shalt.err (%p107)
  %s110 = scalar_lea.sflag [#allocation3], 3
  %111 = vsyncmov %s110
  %s112 = vpop.sfrf %111
  %p113 = scmp.eq.s32.totalorder %s112, 0
  %p114 = pneg %p113
  %116 = shalt.err (%p114)
  %s117 = scalar_lea.sflag [#allocation3], 4
  %118 = vsyncmov %s117
  %s119 = vpop.sfrf %118
  %p120 = scmp.eq.s32.totalorder %s119, 0
  %p121 = pneg %p120
  %123 = shalt.err (%p121)
  %s124 = scalar_lea.sflag [#allocation3], 5
  %125 = vsyncmov %s124
  %s126 = vpop.sfrf %125
  %p127 = scmp.eq.s32.totalorder %s126, 0
  %p128 = pneg %p127
  %130 = shalt.err (%p128)
  %s131 = scalar_lea.sflag [#allocation3], 6
  %132 = vsyncmov %s131
  %s133 = vpop.sfrf %132
  %p134 = scmp.eq.s32.totalorder %s133, 0
  %p135 = pneg %p134
  %137 = shalt.err (%p135)
  %s138 = scalar_lea.sflag [#allocation3], 7
  %139 = vsyncmov %s138
  %s140 = vpop.sfrf %139
  %p141 = scmp.eq.s32.totalorder %s140, 0
  %p142 = pneg %p141
  %144 = shalt.err (%p142)

</llo_original>
